<compile_context>
chip_gen: v5e
topology: v5e:2x2
jax: 0.10.0
libtpu: 0.0.40
codegen_flags: <defaults>
</compile_context>

<pallas_src>
import math
import functools

import jax
import jax.numpy as jnp
from jax import lax
from jax.experimental import pallas as pl
from jax.experimental.pallas import tpu as pltpu


def _round_up(x, m):
    return ((x + m - 1) // m) * m


# ----------------------------------------------------------------------------
# Fused kernel: o = LayerNorm(gelu(x @ W + b))
# ----------------------------------------------------------------------------
def _head_transform_kernel(x_ref, w_ref, b_ref, g_ref, beta_ref, o_ref, *, eps):
    # Cast to bf16 in VMEM right before the MXU (inputs may arrive as f32).
    x = x_ref[...].astype(jnp.bfloat16)
    w = w_ref[...].astype(jnp.bfloat16)
    y = jnp.dot(x, w, preferred_element_type=jnp.float32)
    y = y + b_ref[...]

    # tanh-approx GELU with the 0.5 scale dropped (LayerNorm scale-invariance)
    # and 0.044715 * sqrt(2/pi) pre-folded into a single constant.
    C1 = 0.7978845608028654          # sqrt(2 / pi)
    C2 = 0.044715 * C1
    g = y * (1.0 + jnp.tanh(y * (C1 + C2 * (y * y))))

    # LayerNorm over the hidden dim (hidden dim untiled: full row resident).
    mu = jnp.mean(g, axis=-1, keepdims=True)
    d = g - mu                                     # computed once, reused
    var = jnp.mean(d * d, axis=-1, keepdims=True)
    o_ref[...] = (d * lax.rsqrt(var + eps) * g_ref[...]
                  + beta_ref[...]).astype(o_ref.dtype)


def bert_prediction_head_transform(x, w, b, gamma, beta, *, eps=1e-12,
                                   block_m=512, out_dtype=jnp.bfloat16):
    """Fused dense(H->H) + GELU + LayerNorm.

    x:              [..., H]  activations (any leading dims; flattened to [M, H])
    w:              [H, H]    weight stored [in, out]  (i.e. PyTorch Linear.weight.T)
    b, gamma, beta: [H]
    """
    H = x.shape[-1]
    lead = x.shape[:-1]
    M = math.prod(lead) if lead else 1
    x2d = x.reshape(M, H)

    # Small per-channel vectors: tiny traffic, keep f32 for the epilogue.
    b = b.reshape(1, H).astype(jnp.float32)
    gamma = gamma.reshape(1, H).astype(jnp.float32)
    beta = beta.reshape(1, H).astype(jnp.float32)

    # Row tile: multiple of 8 sublanes; for small M shrink so the grid has at
    # least 2 steps (keeps both v7x TensorCores busy under "parallel").
    if M <= block_m:
        tm = max(8, _round_up(pl.cdiv(M, 2), 8))
    else:
        tm = block_m
    tm = min(tm, _round_up(M, 8))
    grid_m = pl.cdiv(M, tm)          # ragged last block handled by Pallas

    # TODO(synk): weight is fully resident and K/N are untiled; for H > ~2048
    # add an N-tiling grid axis + f32 accumulator + second LN pass.

    # VMEM budget (bytes): double-buffered x/out tiles, single-buffered weight
    # (Buffered(1)), small vectors, plus headroom for the f32 epilogue temps.
    est = (2 * tm * H * x2d.dtype.itemsize
           + 2 * tm * H * jnp.dtype(out_dtype).itemsize
           + H * H * w.dtype.itemsize
           + 3 * _round_up(H, 128) * 4
           + 3 * tm * H * 4)
    vmem_limit = min(64 << 20, max(32 << 20, int(est * 1.5)))

    resident = dict(pipeline_mode=pl.Buffered(1))   # constant index_map blocks

    out = pl.pallas_call(
        functools.partial(_head_transform_kernel, eps=eps),
        grid=(grid_m,),
        in_specs=[
            pl.BlockSpec((tm, H), lambda i: (i, 0)),              # x tile
            pl.BlockSpec((H, H), lambda i: (0, 0), **resident),   # weight
            pl.BlockSpec((1, H), lambda i: (0, 0), **resident),   # bias
            pl.BlockSpec((1, H), lambda i: (0, 0), **resident),   # LN gamma
            pl.BlockSpec((1, H), lambda i: (0, 0), **resident),   # LN beta
        ],
        out_specs=pl.BlockSpec((tm, H), lambda i: (i, 0)),
        out_shape=jax.ShapeDtypeStruct((M, H), out_dtype),
        compiler_params=pltpu.CompilerParams(
            dimension_semantics=("parallel",),
            vmem_limit_bytes=vmem_limit,
        ),
    )(x2d, w, b, gamma, beta)

    return out.reshape(*lead, H)


# ----------------------------------------------------------------------------
# Pure-JAX f32 reference with the EXACT erf GELU of the PyTorch module.
# ----------------------------------------------------------------------------
def _reference_erf(x, w, b, gamma, beta, eps=1e-12):
    y = x.astype(jnp.float32) @ w.astype(jnp.float32) + b.astype(jnp.float32)
    y = 0.5 * y * (1.0 + lax.erf(y * (1.0 / math.sqrt(2.0))))
    mu = y.mean(-1, keepdims=True)
    var = ((y - mu) ** 2).mean(-1, keepdims=True)
    return (y - mu) / jnp.sqrt(var + eps) * gamma + beta


# ----------------------------------------------------------------------------
if __name__ == "__main__":
    # Small but lane-dense (H multiple of 128 so stores are unmasked).
    B, S, H = 2, 8, 128

    key = jax.random.PRNGKey(0)
    k_x, k_w, k_b = jax.random.split(key, 3)
    hidden_states = jax.random.normal(k_x, (B, S, H), jnp.float32)
    dense_w = jax.random.normal(k_w, (H, H), jnp.float32) * 0.02   # [in, out]
    dense_b = jax.random.normal(k_b, (H,), jnp.float32) * 0.02
    ln_gamma = jnp.ones((H,), jnp.float32)
    ln_beta = jnp.zeros((H,), jnp.float32)

    fwd = jax.jit(bert_prediction_head_transform)
    out = fwd(hidden_states, dense_w, dense_b, ln_gamma, ln_beta)
    jax.block_until_ready(out)

    assert out.shape == (B, S, H)
    out_f32 = out.astype(jnp.float32)
    assert bool(jnp.all(jnp.isfinite(out_f32)))

    ref = _reference_erf(hidden_states, dense_w, dense_b, ln_gamma, ln_beta)
    max_err = float(jnp.max(jnp.abs(out_f32 - ref)))
    assert max_err < 5e-2, f"max abs err {max_err} too large"

    print("KERNEL_OK")
</pallas_src>

<mosaic_0001>
module attributes {stable_mosaic.version = 11 : i64} {
  func.func @_head_transform_kernel(%arg0: i32, %arg1: memref<8x128xf32, #tpu.memory_space<vmem>>, %arg2: memref<128x128xf32, #tpu.memory_space<vmem>>, %arg3: memref<1x128xf32, #tpu.memory_space<vmem>>, %arg4: memref<1x128xf32, #tpu.memory_space<vmem>>, %arg5: memref<1x128xf32, #tpu.memory_space<vmem>>, %arg6: memref<8x128xbf16, #tpu.memory_space<vmem>>) attributes {dimension_semantics = [#tpu.dimension_semantics<parallel>], iteration_bounds = array<i64: 2>, scalar_prefetch = 0 : i64, scratch_operands = 0 : i64, tpu.core_type = #tpu.core_type<tc>, window_params = [{transform_indices = @transform_0, window_bounds = array<i64: 8, 128>}, {pipeline_mode = #tpu.pipeline_mode<synchronous>, transform_indices = @transform_1, window_bounds = array<i64: 128, 128>}, {pipeline_mode = #tpu.pipeline_mode<synchronous>, transform_indices = @transform_2, window_bounds = array<i64: 1, 128>}, {pipeline_mode = #tpu.pipeline_mode<synchronous>, transform_indices = @transform_3, window_bounds = array<i64: 1, 128>}, {pipeline_mode = #tpu.pipeline_mode<synchronous>, transform_indices = @transform_4, window_bounds = array<i64: 1, 128>}, {transform_indices = @transform_5, window_bounds = array<i64: 8, 128>}]} {
    %c0 = arith.constant 0 : index
    %c0_0 = arith.constant 0 : index
    %0 = vector.load %arg1[%c0, %c0_0] : memref<8x128xf32, #tpu.memory_space<vmem>>, vector<8x128xf32>
    %1 = arith.truncf %0 : vector<8x128xf32> to vector<8x128xbf16>
    %c0_1 = arith.constant 0 : index
    %c0_2 = arith.constant 0 : index
    %2 = vector.load %arg2[%c0_1, %c0_2] : memref<128x128xf32, #tpu.memory_space<vmem>>, vector<128x128xf32>
    %3 = arith.truncf %2 : vector<128x128xf32> to vector<128x128xbf16>
    %cst = arith.constant dense<0.000000e+00> : vector<8x128xf32>
    %4 = tpu.matmul %1, %3, %cst {dimension_numbers = #tpu.dot_dimension_numbers<[1], [0], [0], [1], [0, 0, 1, 1], [], []>} : vector<8x128xbf16>, vector<128x128xbf16>, vector<8x128xf32> -> vector<8x128xf32>
    %c0_3 = arith.constant 0 : index
    %c0_4 = arith.constant 0 : index
    %5 = vector.load %arg3[%c0_3, %c0_4] : memref<1x128xf32, #tpu.memory_space<vmem>>, vector<1x128xf32>
    %6 = vector.broadcast %5 : vector<1x128xf32> to vector<8x128xf32>
    %7 = arith.addf %4, %6 : vector<8x128xf32>
    %8 = arith.mulf %7, %7 : vector<8x128xf32>
    %cst_5 = arith.constant 0.0356774069 : f32
    %9 = vector.broadcast %cst_5 : f32 to vector<8x128xf32>
    %10 = arith.mulf %9, %8 : vector<8x128xf32>
    %cst_6 = arith.constant 0.797884583 : f32
    %11 = vector.broadcast %cst_6 : f32 to vector<8x128xf32>
    %12 = arith.addf %11, %10 : vector<8x128xf32>
    %13 = arith.mulf %7, %12 : vector<8x128xf32>
    %14 = math.tanh %13 : vector<8x128xf32>
    %cst_7 = arith.constant 1.000000e+00 : f32
    %15 = vector.broadcast %cst_7 : f32 to vector<8x128xf32>
    %16 = arith.addf %15, %14 : vector<8x128xf32>
    %17 = arith.mulf %7, %16 : vector<8x128xf32>
    %cst_8 = arith.constant dense<0.000000e+00> : vector<8xf32>
    %18 = vector.multi_reduction <add>, %17, %cst_8 [1] : vector<8x128xf32> to vector<8xf32>
    %19 = vector.shape_cast %18 : vector<8xf32> to vector<8x1xf32>
    %cst_9 = arith.constant 1.280000e+02 : f32
    %20 = vector.broadcast %cst_9 : f32 to vector<8x1xf32>
    %21 = arith.divf %19, %20 : vector<8x1xf32>
    %22 = vector.broadcast %21 : vector<8x1xf32> to vector<8x128xf32>
    %23 = arith.subf %17, %22 : vector<8x128xf32>
    %24 = arith.mulf %23, %23 : vector<8x128xf32>
    %cst_10 = arith.constant dense<0.000000e+00> : vector<8xf32>
    %25 = vector.multi_reduction <add>, %24, %cst_10 [1] : vector<8x128xf32> to vector<8xf32>
    %26 = vector.shape_cast %25 : vector<8xf32> to vector<8x1xf32>
    %cst_11 = arith.constant 1.280000e+02 : f32
    %27 = vector.broadcast %cst_11 : f32 to vector<8x1xf32>
    %28 = arith.divf %26, %27 : vector<8x1xf32>
    %cst_12 = arith.constant 9.99999996E-13 : f32
    %29 = vector.broadcast %cst_12 : f32 to vector<8x1xf32>
    %30 = arith.addf %28, %29 : vector<8x1xf32>
    %31 = math.rsqrt %30 : vector<8x1xf32>
    %32 = vector.broadcast %31 : vector<8x1xf32> to vector<8x128xf32>
    %33 = arith.mulf %23, %32 : vector<8x128xf32>
    %c0_13 = arith.constant 0 : index
    %c0_14 = arith.constant 0 : index
    %34 = vector.load %arg4[%c0_13, %c0_14] : memref<1x128xf32, #tpu.memory_space<vmem>>, vector<1x128xf32>
    %35 = vector.broadcast %34 : vector<1x128xf32> to vector<8x128xf32>
    %36 = arith.mulf %33, %35 : vector<8x128xf32>
    %c0_15 = arith.constant 0 : index
    %c0_16 = arith.constant 0 : index
    %37 = vector.load %arg5[%c0_15, %c0_16] : memref<1x128xf32, #tpu.memory_space<vmem>>, vector<1x128xf32>
    %38 = vector.broadcast %37 : vector<1x128xf32> to vector<8x128xf32>
    %39 = arith.addf %36, %38 : vector<8x128xf32>
    %40 = arith.truncf %39 : vector<8x128xf32> to vector<8x128xbf16>
    %c0_17 = arith.constant 0 : index
    %c0_18 = arith.constant 0 : index
    %41 = vector.load %arg6[%c0_17, %c0_18] : memref<8x128xbf16, #tpu.memory_space<vmem>>, vector<8x128xbf16>
    tpu.vector_store %arg6[%c0_17, %c0_18], %40 {strides = array<i32>} : memref<8x128xbf16, #tpu.memory_space<vmem>>, vector<8x128xbf16>,
    return
  }
  func.func @transform_0(%arg0: i32) -> (i32, i32) {
    %c0_i32 = arith.constant 0 : i32
    %c0_i32_0 = arith.constant 0 : i32
    return %arg0, %c0_i32 : i32, i32
  }
  func.func @transform_1(%arg0: i32) -> (i32, i32) {
    %c0_i32 = arith.constant 0 : i32
    %c0_i32_0 = arith.constant 0 : i32
    %c0_i32_1 = arith.constant 0 : i32
    return %c0_i32, %c0_i32_0 : i32, i32
  }
  func.func @transform_2(%arg0: i32) -> (i32, i32) {
    %c0_i32 = arith.constant 0 : i32
    %c0_i32_0 = arith.constant 0 : i32
    %c0_i32_1 = arith.constant 0 : i32
    return %c0_i32, %c0_i32_0 : i32, i32
  }
  func.func @transform_3(%arg0: i32) -> (i32, i32) {
    %c0_i32 = arith.constant 0 : i32
    %c0_i32_0 = arith.constant 0 : i32
    %c0_i32_1 = arith.constant 0 : i32
    return %c0_i32, %c0_i32_0 : i32, i32
  }
  func.func @transform_4(%arg0: i32) -> (i32, i32) {
    %c0_i32 = arith.constant 0 : i32
    %c0_i32_0 = arith.constant 0 : i32
    %c0_i32_1 = arith.constant 0 : i32
    return %c0_i32, %c0_i32_0 : i32, i32
  }
  func.func @transform_5(%arg0: i32) -> (i32, i32) {
    %c0_i32 = arith.constant 0 : i32
    %c0_i32_0 = arith.constant 0 : i32
    return %arg0, %c0_i32 : i32, i32
  }
}

</mosaic_0001>

<llo_original>
// kernel: bert_prediction_head_transform.1
$region0: #{bert_prediction_head_transform.1}
  #allocation0 [shape = 'u32[]', space=smem, size = 0x4, offset = 0x4, fixed_abs, tag = 'smem constant byte address 0x4 - core index']
  #allocation1 [shape = 'u32[72,128]{1,0:T(1,128)}', space=vmem, size = 0x9000, scoped, tag = 'internal scratch']
  %s0 = inlined_call_operand.hbm [shape: f32[16,128], index: 0, kind: input, shape index: {}]
  %s1 = inlined_call_operand.hbm [shape: f32[128,128], index: 1, kind: input, shape index: {}]
  %s2 = inlined_call_operand.vmem [shape: f32[1,128], index: 2, kind: input, shape index: {}]
  %s3 = inlined_call_operand.vmem [shape: f32[1,128], index: 3, kind: input, shape index: {}]
  %s4 = inlined_call_operand.vmem [shape: f32[1,128], index: 4, kind: input, shape index: {}]
  %s5 = inlined_call_operand.hbm [shape: bf16[16,128], index: 5, kind: output, shape index: {}]
  %s6 = sld [smem:[#allocation0]]
  $region61: #{bert_prediction_head_transform.1} parent=0
    _
  %s8 = ssub.s32 1, %s6
  %s9 = scalar_select 0, %s8, %s6
  $region1: #{bert_prediction_head_transform.1} parent=0
    #allocation2 [shape = 'u8[8192]{0}', space=vmem, size = 0x2000, scoped, tag = 'input window, operand 0']
    #allocation3 [shape = 's32[2]{0}', space=sflag, size = 0x8, scoped, tag = 'scoped memory for bert_prediction_head_transform.1']
    #allocation4 [shape = 's32[2]{0}', space=sflag, size = 0x8, scoped, tag = 'scoped memory for bert_prediction_head_transform.1']
    #allocation5 [shape = 'u8[65536]{0}', space=vmem, size = 0x10000, scoped, tag = 'input window, operand 1, single buffered']
    #allocation6 [shape = 's32[1]{0}', space=sflag, size = 0x4, scoped, tag = 'scoped memory for bert_prediction_head_transform.1']
    #allocation7 [shape = 'u8[4096]{0}', space=vmem, size = 0x1000, scoped, tag = 'output window, operand 0']
    %10 = vsyncpa [#allocation3], 0
    %s11 = scalar_lea.sflag [#allocation3], 1
    %12 = vsyncpa %s11, 0
    %13 = vsyncpa [#allocation6], 0
    %14 = vsyncpa [#allocation4], 0
    %s15 = scalar_lea.sflag [#allocation4], 1
    %16 = vsyncpa %s15, 0
    loop: start=0, step=1, limit=4
    $region2: #{bert_prediction_head_transform.1} parent=1 // loop_pre_header
      _
    $region3: #{bert_prediction_head_transform.1} parent=1 // loop_header
      %s18 = sphi 0, %s22
      %p19 = scmp.ge.s32.totalorder %s18, 4
      %s28 = sphi 0, %s30
      %s31 = sphi 0, %s28
      %s32 = sphi 0, %s31
      %s48 = sphi 0, %s32
      %s52 = sphi 0, %s52
      %s54 = sphi 0, %s52
      %s55 = sphi 0, %s54
      %s69 = sphi 0, %s55
      %s73 = sphi 0, %s73
      %s75 = sphi 0, %s73
      %s76 = sphi 0, %s75
      %s90 = sphi 0, %s76
      %s94 = sphi 0, %s94
      %s96 = sphi 0, %s94
      %s97 = sphi 0, %s96
      %s111 = sphi 0, %s97
      %s115 = sphi 0, %s115
      %s117 = sphi 0, %s115
      %s118 = sphi 0, %s117
      %s132 = sphi 0, %s118
      %s138 = sphi 0, %s140
      %s141 = sphi 0, %s138
      %s142 = sphi 0, %s141
      %s158 = sphi 0, %s142
    $region4: #{bert_prediction_head_transform.1} parent=1 // loop_header_branch
      %21 = sbr.rel (%p19) target = $region8
    $region5: #{bert_prediction_head_transform.1} parent=1 // loop_body
      %s23 = ssub.s32 %s18, 1
      %s24 = ssub.s32 %s18, 2
      %s25 = sadd.s32 %s18, 1
      %s26 = ssub.s32 %s18, %s25
      %p27 = scmp.eq.s32.totalorder %s26, 0
      %s29 = sadd.s32 %s28, 1
      %s30 = scalar_select %p27, %s28, %s29
      %p33 = pneg %p27
      %p34 = scmp.eq.s32.totalorder %s18, 1
      %p35 = por %p33, %p34
      %p36 = scmp.ne.s32.totalorder %s28, %s31
      %p37 = scmp.eq.s32.totalorder %s18, 0
      %p38 = por %p36, %p37
      %p39 = scmp.ne.s32.totalorder %s28, %s31
      %p40 = scmp.eq.s32.totalorder %s23, 1
      %p41 = por %p39, %p40
      %p42 = scmp.ne.s32.totalorder %s31, %s32
      %p43 = scmp.eq.s32.totalorder %s23, 0
      %p44 = por %p42, %p43
      %p45 = scmp.ne.s32.totalorder %s31, %s32
      %p46 = scmp.eq.s32.totalorder %s24, 1
      %p47 = por %p45, %p46
      %p49 = scmp.ne.s32.totalorder %s32, %s48
      %p50 = scmp.eq.s32.totalorder %s24, 0
      %p51 = por %p49, %p50
      %s53 = sadd.s32 %s52, 1
      %p56 = scmp.eq.s32.totalorder %s18, 1
      %p57 = scmp.ne.s32.totalorder %s52, %s54
      %p58 = scmp.eq.s32.totalorder %s18, 0
      %p59 = por %p57, %p58
      %p60 = scmp.ne.s32.totalorder %s52, %s54
      %p61 = scmp.eq.s32.totalorder %s23, 1
      %p62 = por %p60, %p61
      %p63 = scmp.ne.s32.totalorder %s54, %s55
      %p64 = scmp.eq.s32.totalorder %s23, 0
      %p65 = por %p63, %p64
      %p66 = scmp.ne.s32.totalorder %s54, %s55
      %p67 = scmp.eq.s32.totalorder %s24, 1
      %p68 = por %p66, %p67
      %p70 = scmp.ne.s32.totalorder %s55, %s69
      %p71 = scmp.eq.s32.totalorder %s24, 0
      %p72 = por %p70, %p71
      %s74 = sadd.s32 %s73, 1
      %p77 = scmp.eq.s32.totalorder %s18, 1
      %p78 = scmp.ne.s32.totalorder %s73, %s75
      %p79 = scmp.eq.s32.totalorder %s18, 0
      %p80 = por %p78, %p79
      %p81 = scmp.ne.s32.totalorder %s73, %s75
      %p82 = scmp.eq.s32.totalorder %s23, 1
      %p83 = por %p81, %p82
      %p84 = scmp.ne.s32.totalorder %s75, %s76
      %p85 = scmp.eq.s32.totalorder %s23, 0
      %p86 = por %p84, %p85
      %p87 = scmp.ne.s32.totalorder %s75, %s76
      %p88 = scmp.eq.s32.totalorder %s24, 1
      %p89 = por %p87, %p88
      %p91 = scmp.ne.s32.totalorder %s76, %s90
      %p92 = scmp.eq.s32.totalorder %s24, 0
      %p93 = por %p91, %p92
      %s95 = sadd.s32 %s94, 1
      %p98 = scmp.eq.s32.totalorder %s18, 1
      %p99 = scmp.ne.s32.totalorder %s94, %s96
      %p100 = scmp.eq.s32.totalorder %s18, 0
      %p101 = por %p99, %p100
      %p102 = scmp.ne.s32.totalorder %s94, %s96
      %p103 = scmp.eq.s32.totalorder %s23, 1
      %p104 = por %p102, %p103
      %p105 = scmp.ne.s32.totalorder %s96, %s97
      %p106 = scmp.eq.s32.totalorder %s23, 0
      %p107 = por %p105, %p106
      %p108 = scmp.ne.s32.totalorder %s96, %s97
      %p109 = scmp.eq.s32.totalorder %s24, 1
      %p110 = por %p108, %p109
      %p112 = scmp.ne.s32.totalorder %s97, %s111
      %p113 = scmp.eq.s32.totalorder %s24, 0
      %p114 = por %p112, %p113
      %s116 = sadd.s32 %s115, 1
      %p119 = scmp.eq.s32.totalorder %s18, 1
      %p120 = scmp.ne.s32.totalorder %s115, %s117
      %p121 = scmp.eq.s32.totalorder %s18, 0
      %p122 = por %p120, %p121
      %p123 = scmp.ne.s32.totalorder %s115, %s117
      %p124 = scmp.eq.s32.totalorder %s23, 1
      %p125 = por %p123, %p124
      %p126 = scmp.ne.s32.totalorder %s117, %s118
      %p127 = scmp.eq.s32.totalorder %s23, 0
      %p128 = por %p126, %p127
      %p129 = scmp.ne.s32.totalorder %s117, %s118
      %p130 = scmp.eq.s32.totalorder %s24, 1
      %p131 = por %p129, %p130
      %p133 = scmp.ne.s32.totalorder %s118, %s132
      %p134 = scmp.eq.s32.totalorder %s24, 0
      %p135 = por %p133, %p134
      %s136 = ssub.s32 %s18, %s25
      %p137 = scmp.eq.s32.totalorder %s136, 0
      %s139 = sadd.s32 %s138, 1
      %s140 = scalar_select %p137, %s138, %s139
      %p143 = pneg %p137
      %p144 = scmp.eq.s32.totalorder %s18, 1
      %p145 = por %p143, %p144
      %p146 = scmp.ne.s32.totalorder %s138, %s141
      %p147 = scmp.eq.s32.totalorder %s18, 0
      %p148 = por %p146, %p147
      %p149 = scmp.ne.s32.totalorder %s138, %s141
      %p150 = scmp.eq.s32.totalorder %s23, 1
      %p151 = por %p149, %p150
      %p152 = scmp.ne.s32.totalorder %s141, %s142
      %p153 = scmp.eq.s32.totalorder %s23, 0
      %p154 = por %p152, %p153
      %p155 = scmp.ne.s32.totalorder %s141, %s142
      %p156 = scmp.eq.s32.totalorder %s24, 1
      %p157 = por %p155, %p156
      %p159 = scmp.ne.s32.totalorder %s142, %s158
      %p160 = scmp.eq.s32.totalorder %s24, 0
      %p161 = por %p159, %p160
      %p162 = scmp.le.s32.totalorder 1, %s18
      %p163 = scmp.lt.s32.totalorder %s18, 3
      %p164 = pnand %p162, %p163
      %p165 = pneg %p164
      // Predicated region
      $region9: #{bert_prediction_head_transform.1} parent=5 // pred_check
        _
      $region10: #{bert_prediction_head_transform.1} parent=5 // pred_check_branch
        %167 = sbr.rel (%p164) target = $region12
      $region11: #{bert_prediction_head_transform.1} parent=5 // pred_region
        %s168 = ssub.s32 %s18, 1
        // Predicated region
        $region13: #{bert_prediction_head_transform.1} parent=11 // pred_check
          %p169 = pneg %p65
        $region14: #{bert_prediction_head_transform.1} parent=11 // pred_check_branch
          %171 = sbr.rel (%p169) target = $region16
        $region15: #{bert_prediction_head_transform.1} parent=11 // pred_region
          %173 = vsyncadd [#allocation6], 0
          %s174 = sshll.u32 %s1, 4
          %s175 = int_to_ptr.hbm [resolvable:$true] %s174
          %s176 = sshll.u32 [#allocation5], 4
          %s177 = int_to_ptr.vmem [resolvable:$true] %s176
          %182 = dma.hbm_to_vmem [thread:$0]  %s175, 2048, %s177, [#allocation6], 128, 128, 8
        $region16: #{bert_prediction_head_transform.1} parent=11 // pred_fallthru
          _
        // Predicated region
        $region17: #{bert_prediction_head_transform.1} parent=11 // pred_check
          %p183 = pneg %p86
        $region18: #{bert_prediction_head_transform.1} parent=11 // pred_check_branch
          %185 = sbr.rel (%p183) target = $region20
        $region19: #{bert_prediction_head_transform.1} parent=11 // pred_region
          _
        $region20: #{bert_prediction_head_transform.1} parent=11 // pred_fallthru
          _
        // Predicated region
        $region21: #{bert_prediction_head_transform.1} parent=11 // pred_check
          %p186 = pneg %p107
        $region22: #{bert_prediction_head_transform.1} parent=11 // pred_check_branch
          %188 = sbr.rel (%p186) target = $region24
        $region23: #{bert_prediction_head_transform.1} parent=11 // pred_region
          _
        $region24: #{bert_prediction_head_transform.1} parent=11 // pred_fallthru
          _
        // Predicated region
        $region25: #{bert_prediction_head_transform.1} parent=11 // pred_check
          %p189 = pneg %p128
        $region26: #{bert_prediction_head_transform.1} parent=11 // pred_check_branch
          %191 = sbr.rel (%p189) target = $region28
        $region27: #{bert_prediction_head_transform.1} parent=11 // pred_region
          _
        $region28: #{bert_prediction_head_transform.1} parent=11 // pred_fallthru
          _
      $region12: #{bert_prediction_head_transform.1} parent=5 // pred_fallthru
        _
      %p192 = scmp.lt.s32.totalorder %s18, 2
      // Predicated region
      $region29: #{bert_prediction_head_transform.1} parent=5 // pred_check
        %p193 = pneg %p192
      $region30: #{bert_prediction_head_transform.1} parent=5 // pred_check_branch
        %195 = sbr.rel (%p193) target = $region32
      $region31: #{bert_prediction_head_transform.1} parent=5 // pred_region
        // Predicated region
        $region33: #{bert_prediction_head_transform.1} parent=31 // pred_check
          %p196 = pneg %p38
        $region34: #{bert_prediction_head_transform.1} parent=31 // pred_check_branch
          %198 = sbr.rel (%p196) target = $region36
        $region35: #{bert_prediction_head_transform.1} parent=31 // pred_region
          %s199 = sand.u32 %s28, 1
          %s200 = scalar_lea.sflag [#allocation3], %s199
          %s201 = sand.u32 %s28, 1
          %s202 = smul.addr %s201, 8
          %s203 = scalar_lea.vmem [#allocation2], %s202
          %205 = vsyncadd %s200, 0
          %s206 = smul.addr %s18, 8
          %s207 = scalar_lea.hbm %s0, %s206
          %s209 = sshll.u32 %s207, 4
          %s210 = int_to_ptr.hbm [resolvable:$true] %s209
          %s211 = sshll.u32 %s203, 4
          %s212 = int_to_ptr.vmem [resolvable:$true] %s211
          %214 = dma.hbm_to_vmem [thread:$0]  %s210, 128, %s212, %s200
        $region36: #{bert_prediction_head_transform.1} parent=31 // pred_fallthru
          _
      $region32: #{bert_prediction_head_transform.1} parent=5 // pred_fallthru
        _
      %p215 = scmp.le.s32.totalorder 1, %s18
      %p216 = scmp.lt.s32.totalorder %s18, 3
      %p217 = pnand %p215, %p216
      %p218 = pneg %p217
      // Predicated region
      $region37: #{bert_prediction_head_transform.1} parent=5 // pred_check
        _
      $region38: #{bert_prediction_head_transform.1} parent=5 // pred_check_branch
        %220 = sbr.rel (%p217) target = $region40
      $region39: #{bert_prediction_head_transform.1} parent=5 // pred_region
        %s221 = ssub.s32 %s18, 1
        %s222 = sand.u32 %s31, 1
        %s223 = scalar_lea.sflag [#allocation3], %s222
        %s224 = sand.u32 %s31, 1
        %s225 = smul.addr %s224, 8
        %s226 = scalar_lea.vmem [#allocation2], %s225
        // Predicated region
        $region41: #{bert_prediction_head_transform.1} parent=39 // pred_check
          %p227 = pneg %p44
        $region42: #{bert_prediction_head_transform.1} parent=39 // pred_check_branch
          %229 = sbr.rel (%p227) target = $region44
        $region43: #{bert_prediction_head_transform.1} parent=39 // pred_region
          %231 = dma.done %s223, 128
        $region44: #{bert_prediction_head_transform.1} parent=39 // pred_fallthru
          _
        // Predicated region
        $region45: #{bert_prediction_head_transform.1} parent=39 // pred_check
          %p232 = pneg %p65
        $region46: #{bert_prediction_head_transform.1} parent=39 // pred_check_branch
          %234 = sbr.rel (%p232) target = $region48
        $region47: #{bert_prediction_head_transform.1} parent=39 // pred_region
          %236 = dma.done [#allocation6], 2048
        $region48: #{bert_prediction_head_transform.1} parent=39 // pred_fallthru
          _
        %s237 = sand.u32 %s31, 1
        %s238 = scalar_lea.sflag [#allocation3], %s237
        %s239 = sand.u32 %s31, 1
        %s240 = smul.addr %s239, 8
        %s241 = scalar_lea.vmem [#allocation2], %s240
        %p242 = pneg %p44
        %p243 = pneg %p41
        %p244 = pneg %p65
        %p245 = pneg %p62
        %p246 = pneg %p86
        %p247 = pneg %p83
        %p248 = pneg %p107
        %p249 = pneg %p104
        %p250 = pneg %p128
        %p251 = pneg %p125
        %p252 = pneg %p154
        %p253 = pneg %p151
        %s254 = sand.u32 %s141, 1
        %s255 = scalar_lea.sflag [#allocation4], %s254
        %s256 = sand.u32 %s141, 1
        %s257 = smul.addr %s256, 4
        %s258 = scalar_lea.vmem [#allocation7], %s257
        %v259 = vld [vmem:[%s226] sm:$0xff]
        %v260 = vpack.c.bf16 %v259, %v259
        %v261 = vld [vmem:[#allocation5] sm:$0xff]
        %v262 = vld [vmem:[#allocation5 + $0x8] sm:$0xff]
        %v263 = vld [vmem:[#allocation5 + $0x10] sm:$0xff]
        %v264 = vld [vmem:[#allocation5 + $0x18] sm:$0xff]
        %v265 = vld [vmem:[#allocation5 + $0x20] sm:$0xff]
        %v266 = vld [vmem:[#allocation5 + $0x28] sm:$0xff]
        %v267 = vld [vmem:[#allocation5 + $0x30] sm:$0xff]
        %v268 = vld [vmem:[#allocation5 + $0x38] sm:$0xff]
        %v269 = vld [vmem:[#allocation5 + $0x40] sm:$0xff]
        %v270 = vld [vmem:[#allocation5 + $0x48] sm:$0xff]
        %v271 = vld [vmem:[#allocation5 + $0x50] sm:$0xff]
        %v272 = vld [vmem:[#allocation5 + $0x58] sm:$0xff]
        %v273 = vld [vmem:[#allocation5 + $0x60] sm:$0xff]
        %v274 = vld [vmem:[#allocation5 + $0x68] sm:$0xff]
        %v275 = vld [vmem:[#allocation5 + $0x70] sm:$0xff]
        %v276 = vld [vmem:[#allocation5 + $0x78] sm:$0xff]
        %v277 = vpack.c.bf16 %v262, %v261
        %v278 = vpack.c.bf16 %v264, %v263
        %v279 = vpack.c.bf16 %v266, %v265
        %v280 = vpack.c.bf16 %v268, %v267
        %v281 = vpack.c.bf16 %v270, %v269
        %v282 = vpack.c.bf16 %v272, %v271
        %v283 = vpack.c.bf16 %v274, %v273
        %v284 = vpack.c.bf16 %v276, %v275
        %v285 = vld [vmem:[%s2] sm:$0x1]
        %v287 = vperm.slane %v285, 0
        %289 = vmatpush.bf16.msra.mxu0 %v284
        %290 = vmatpush.bf16.msra.mxu0 %v283
        %291 = vmatpush.bf16.msra.mxu0 %v282
        %292 = vmatpush.bf16.msra.mxu0 %v281
        %293 = vmatpush.bf16.msra.mxu0 %v280
        %294 = vmatpush.bf16.msra.mxu0 %v279
        %295 = vmatpush.bf16.msra.mxu0 %v278
        %296 = vmatpush.bf16.msra.mxu0 %v277
        %297 = vmatmul.bf16.gmra.mxu0 %v260
        %v298 = vpop.f32.mrf.mxu0
        %v299 = vadd.f32 %v287, %v298
        %v300 = vpop.f32.mrf.mxu0
        %301 = vdwg.mxu0
        %v302 = vmul.f32 %v299, %v299
        %v303 = vmul.f32 %v302, 0.035677407
        %v304 = vadd.f32 %v303, 0.7978846
        %v305 = vmul.f32 %v299, %v304
        %v306 = vtanh.pop %v305
        %v307 = vadd.f32 %v306, 1.0
        %v308 = vmul.f32 %v299, %v307
        %309 = vadd.xlane.f32.xlu0 %v308
        %v310 = vpop.xlane.xlu0 %309
        %v311 = vrcp.pop 128.0
        %v312 = vmul.f32 128.0, %v311
        %v313 = vsub.f32 1.0, %v312
        %v314 = vmul.f32 %v311, %v313
        %v315 = vadd.f32 %v311, %v314
        %vm316 = vweird.f32 %v311
        %v317 = vsel %vm316, %v311, %v315
        %v318 = vmul.f32 %v310, %v317
        %v319 = vsub.f32 %v308, %v318
        %v320 = vmul.f32 %v319, %v319
        %321 = vadd.xlane.f32.xlu0 %v320
        %v322 = vpop.xlane.xlu0 %321
        %v323 = vmul.f32 %v322, %v317
        %v324 = vadd.f32 %v323, 1e-12
        %v325 = vrsqrt.pop %v324
        %v326 = vmul.f32 %v325, %v324
        %v327 = vmul.f32 %v326, %v325
        %v328 = vmul.f32 0.5, %v327
        %v329 = vsub.f32 1.5, %v328
        %v330 = vmul.f32 %v325, %v329
        %vm331 = vweird.f32 %v324
        %vm332 = vweird.f32 %v325
        %vm333 = vmor %vm331, %vm332
        %v334 = vsel %vm333, %v325, %v330
        %v335 = vmul.f32 %v319, %v334
        %v336 = vld [vmem:[%s3] sm:$0x1]
        %v338 = vperm.slane %v336, 0
        %v340 = vmul.f32 %v335, %v338
        %v341 = vld [vmem:[%s4] sm:$0x1]
        %v343 = vperm.slane %v341, 0
        %v345 = vadd.f32 %v340, %v343
        %v346 = vpack.c.bf16 %v345, %v345
        %347 = vst [vmem:[%s258] sm:$0xf] %v346
        %s348 = sand.u32 %s141, 1
        %s349 = scalar_lea.sflag [#allocation4], %s348
        %s350 = sand.u32 %s141, 1
        %s351 = smul.addr %s350, 4
        %s352 = scalar_lea.vmem [#allocation7], %s351
        // Predicated region
        $region49: #{bert_prediction_head_transform.1} parent=39 // pred_check
          %p353 = pneg %p151
        $region50: #{bert_prediction_head_transform.1} parent=39 // pred_check_branch
          %355 = sbr.rel (%p353) target = $region52
        $region51: #{bert_prediction_head_transform.1} parent=39 // pred_region
          %357 = vsyncadd %s349, 0
          %s358 = smul.addr %s23, 4
          %s359 = scalar_lea.hbm %s5, %s358
          %s361 = sshll.u32 %s352, 4
          %s362 = int_to_ptr.vmem [resolvable:$true] %s361
          %s363 = sshll.u32 %s359, 4
          %s364 = int_to_ptr.hbm [resolvable:$true] %s363
          %366 = dma.vmem_to_hbm [thread:$0]  %s362, 64, %s364, %s349
        $region52: #{bert_prediction_head_transform.1} parent=39 // pred_fallthru
          _
      $region40: #{bert_prediction_head_transform.1} parent=5 // pred_fallthru
        _
      %p367 = scmp.le.s32.totalorder 2, %s18
      // Predicated region
      $region53: #{bert_prediction_head_transform.1} parent=5 // pred_check
        %p368 = pneg %p367
      $region54: #{bert_prediction_head_transform.1} parent=5 // pred_check_branch
        %370 = sbr.rel (%p368) target = $region56
      $region55: #{bert_prediction_head_transform.1} parent=5 // pred_region
        %s371 = ssub.s32 %s18, 2
        // Predicated region
        $region57: #{bert_prediction_head_transform.1} parent=55 // pred_check
          %p372 = pneg %p157
        $region58: #{bert_prediction_head_transform.1} parent=55 // pred_check_branch
          %374 = sbr.rel (%p372) target = $region60
        $region59: #{bert_prediction_head_transform.1} parent=55 // pred_region
          %s375 = sand.u32 %s142, 1
          %s376 = scalar_lea.sflag [#allocation4], %s375
          %s377 = sand.u32 %s142, 1
          %s378 = smul.addr %s377, 4
          %s379 = scalar_lea.vmem [#allocation7], %s378
          %381 = dma.done %s376, 64
        $region60: #{bert_prediction_head_transform.1} parent=55 // pred_fallthru
          _
      $region56: #{bert_prediction_head_transform.1} parent=5 // pred_fallthru
        _
    $region6: #{bert_prediction_head_transform.1} parent=1 // loop_footer
      %s22 = sadd.s32 1, %s18
    $region7: #{bert_prediction_head_transform.1} parent=1 // loop_footer_branch
      %17 = sbr.rel target = $region3
    $region8: #{bert_prediction_head_transform.1} parent=1 // loop_exit
      _
    %382 = vsyncpa [#allocation3], 1
    %s383 = scalar_lea.sflag [#allocation3], 1
    %384 = vsyncpa %s383, 1
    %385 = vsyncpa [#allocation6], 1
    %386 = vsyncpa [#allocation4], 1
    %s387 = scalar_lea.sflag [#allocation4], 1
    %388 = vsyncpa %s387, 1

</llo_original>
